<compile_context>
chip_gen: v6e
topology: v6e:2x2x1
jax: 0.10.0
libtpu: 0.0.40
codegen_flags: <defaults>
</compile_context>

<pallas_src>
import functools

import jax
import jax.numpy as jnp
from jax import lax
from jax.experimental import pallas as pl
from jax.experimental.pallas import tpu as pltpu


def _round_up(x, m):
    return ((x + m - 1) // m) * m


def _default_compute_dtype():
    # bf16 MXU operands on TPU; f32 elsewhere (CPU dot thunk rejects bf16xbf16=f32).
    return jnp.bfloat16 if jax.default_backend() == "tpu" else jnp.float32


def _resident_spec(shape):
    """BlockSpec for a grid-invariant (resident) operand; single-buffered if supported."""
    index_map = lambda b, t: (0,) * len(shape)
    if hasattr(pl, "Buffered"):
        try:
            return pl.BlockSpec(shape, index_map, pipeline_mode=pl.Buffered(1))
        except TypeError:  # older jax without pipeline_mode kwarg
            pass
    return pl.BlockSpec(shape, index_map)


def _gru_recurrence_kernel(gi_ref, wh_ref, bhn_ref, h_out_ref, h_scr,
                           *, tt, hidden, reverse):
    """Sequential GRU recurrence over one (batch block, time block).

    gi_ref   : (tt, bb, 3H) precomputed input pre-activations (compute dtype)
               [x@W_ir + b_ir + b_hr | x@W_iz + b_iz + b_hz | x@W_in + b_in]
    wh_ref   : (H, 3H)  fused hidden weights [W_hr | W_hz | W_hn] (compute dtype)
    bhn_ref  : (1, H)   candidate-gate hidden bias (kept separate: r-gated)
    h_out_ref: (tt, bb, H) per-step hidden states (compute dtype output)
    h_scr    : (bb, H)  f32 hidden state, persists across time blocks
    """
    # New batch block => reset hidden state (time axis is program_id(1)).
    @pl.when(pl.program_id(1) == 0)
    def _init():
        h_scr[...] = jnp.zeros_like(h_scr)

    w_h = wh_ref[...]                                              # (H, 3H)
    bb = h_scr.shape[0]
    # Hoist the broadcast out of the unrolled loop (no CSE of broadcast_in_dim).
    b_hn = jnp.broadcast_to(bhn_ref[...].astype(jnp.float32), (bb, hidden))

    def step(i, h):
        # reverse => walk this time block back-to-front (offline GRUEncoder)
        t = (tt - 1 - i) if reverse else i
        gi = gi_ref[t].astype(jnp.float32)                         # (bb, 3H)
        gh = jnp.dot(h.astype(w_h.dtype), w_h,
                     preferred_element_type=jnp.float32)           # one MXU pass
        r = jax.nn.sigmoid(gi[:, :hidden] + gh[:, :hidden])
        z = jax.nn.sigmoid(gi[:, hidden:2 * hidden] + gh[:, hidden:2 * hidden])
        n = jnp.tanh(gi[:, 2 * hidden:] + r * (gh[:, 2 * hidden:] + b_hn))
        h_new = (1.0 - z) * n + z * h
        h_out_ref[t] = h_new.astype(h_out_ref.dtype)
        return h_new

    h_scr[...] = lax.fori_loop(0, tt, step, h_scr[...], unroll=True)


def gru_encoder_forward(x, params, online=False, *, tt=8, bb=None,
                        compute_dtype=None):
    """x: (B, T, I) batch-first (like the PyTorch module). Returns (B, T, O) f32."""
    if compute_dtype is None:
        compute_dtype = _default_compute_dtype()
    cdt = compute_dtype

    B, T, I = x.shape
    H = params["w_hr"].shape[0]
    O = params["w_lin"].shape[1]

    # ---- (8,128)-friendly padding -------------------------------------------
    Hp = _round_up(H, 128)
    Op = _round_up(O, 128)
    Bp = _round_up(B, 8)
    if bb is None:
        bb = Bp                      # single batch block (set Bp//2 on v7x: 2 TCs)
    else:
        bb = _round_up(max(8, min(bb, Bp)), 8)
        Bp = _round_up(Bp, bb)
    nb = Bp // bb

    # ---- time blocking (TT steps per grid iteration) -------------------------
    tt = max(1, min(tt, T))
    nt = -(-T // tt)                 # ceil(T / tt)
    Tp = nt * tt
    pad_t = Tp - T
    reverse = not online

    # Pad x (cheap, I-wide) instead of gi. Padded steps sit on the side that is
    # processed LAST (front for the reverse walk, back for the forward walk) so
    # they never contaminate hidden states of real steps; padded outputs are
    # sliced off below.
    t_pad_cfg = (pad_t, 0) if reverse else (0, pad_t)
    x_p = jnp.pad(x, ((0, Bp - B), t_pad_cfg, (0, 0)))

    def padw(w, rows, cols):
        return jnp.pad(w, ((0, rows - w.shape[0]), (0, cols - w.shape[1])))

    # ---- fused / padded weights ----------------------------------------------
    w_icat = jnp.concatenate([padw(params["w_ir"], I, Hp),
                              padw(params["w_iz"], I, Hp),
                              padw(params["w_in"], I, Hp)], axis=1).astype(cdt)   # (I, 3Hp)
    w_hcat = jnp.concatenate([padw(params["w_hr"], Hp, Hp),
                              padw(params["w_hz"], Hp, Hp),
                              padw(params["w_hn"], Hp, Hp)], axis=1).astype(cdt)  # (Hp, 3Hp)
    b_ifold = jnp.concatenate([padw(params["b_ir"] + params["b_hr"], 1, Hp),
                               padw(params["b_iz"] + params["b_hz"], 1, Hp),
                               padw(params["b_in"], 1, Hp)],
                              axis=1).astype(jnp.float32)                         # (1, 3Hp)
    b_hn = padw(params["b_hn"], 1, Hp).astype(jnp.float32)                        # (1, Hp)

    # ---- hoisted input projection: one big GEMM over all time steps ----------
    # Stored in compute dtype (bf16 on TPU) to halve the dominant HBM stream.
    gi = (jnp.einsum("bti,ih->tbh", x_p.astype(cdt), w_icat,
                     preferred_element_type=jnp.float32) + b_ifold).astype(cdt)   # (Tp,Bp,3Hp)

    # ---- BlockSpecs / grid ----------------------------------------------------
    if reverse:
        blk_map = lambda b, t: (nt - 1 - t, b, 0)    # walk time blocks back-to-front
    else:
        blk_map = lambda b, t: (t, b, 0)

    # ---- explicit VMEM budget -------------------------------------------------
    isz = jnp.dtype(cdt).itemsize
    gi_blk = tt * bb * 3 * Hp * isz
    out_blk = tt * bb * Hp * isz
    w_bytes = (Hp * 3 * Hp + Hp) * isz
    scr_bytes = bb * Hp * 4
    vmem_limit = 2 * gi_blk + 2 * out_blk + 2 * w_bytes + scr_bytes + (4 << 20)
    vmem_limit = int(min(max(vmem_limit, 16 << 20), 96 << 20))

    kernel = functools.partial(_gru_recurrence_kernel,
                               tt=tt, hidden=Hp, reverse=reverse)

    h_all = pl.pallas_call(
        kernel,
        out_shape=jax.ShapeDtypeStruct((Tp, Bp, Hp), cdt),
        grid_spec=pltpu.PrefetchScalarGridSpec(
            num_scalar_prefetch=0,
            grid=(nb, nt),
            in_specs=[
                pl.BlockSpec((tt, bb, 3 * Hp), blk_map),   # pre-activations
                _resident_spec((Hp, 3 * Hp)),              # fused W_h (resident, 1-buf)
                _resident_spec((1, Hp)),                   # b_hn      (resident, 1-buf)
            ],
            out_specs=pl.BlockSpec((tt, bb, Hp), blk_map),
            scratch_shapes=[pltpu.VMEM((bb, Hp), jnp.float32)],
        ),
        compiler_params=pltpu.CompilerParams(
            dimension_semantics=("parallel", "arbitrary"),  # batch parallel, time sequential
            vmem_limit_bytes=vmem_limit),
    )(gi, w_hcat, b_hn)

    # ---- strip padding, hoisted output projection (bf16 operands, f32 acc) ----
    h_real = (h_all[pad_t:] if reverse else h_all[:T])[:, :B, :]    # (T, B, Hp)
    w_lin = padw(params["w_lin"], Hp, Op).astype(cdt)
    out = jnp.einsum("tbh,ho->bto", h_real, w_lin,
                     preferred_element_type=jnp.float32)            # (B, T, Op) f32
    return out[:, :, :O] + params["b_lin"]


def init_params(key, input_size, hidden_size, output_size):
    """Deterministic synthetic init mirroring nn.GRU / nn.Linear shapes
    (weights stored pre-transposed: (in, out))."""
    ks = jax.random.split(key, 14)
    s = 1.0 / jnp.sqrt(jnp.float32(hidden_size))

    def u(k, shape):
        return jax.random.uniform(k, shape, jnp.float32, -s, s)

    return {
        "w_ir": u(ks[0], (input_size, hidden_size)),
        "w_iz": u(ks[1], (input_size, hidden_size)),
        "w_in": u(ks[2], (input_size, hidden_size)),
        "w_hr": u(ks[3], (hidden_size, hidden_size)),
        "w_hz": u(ks[4], (hidden_size, hidden_size)),
        "w_hn": u(ks[5], (hidden_size, hidden_size)),
        "b_ir": u(ks[6], (1, hidden_size)),
        "b_iz": u(ks[7], (1, hidden_size)),
        "b_in": u(ks[8], (1, hidden_size)),
        "b_hr": u(ks[9], (1, hidden_size)),
        "b_hz": u(ks[10], (1, hidden_size)),
        "b_hn": u(ks[11], (1, hidden_size)),
        "w_lin": u(ks[12], (hidden_size, output_size)),
        "b_lin": u(ks[13], (1, output_size)),
    }


def gru_encoder_ref(x, params, online=False, compute_dtype=None):
    """Pure-JAX reference (torch.nn.GRU + nn.Linear semantics), cast-matched to
    the kernel's compute-dtype operands / f32 accumulation."""
    if compute_dtype is None:
        compute_dtype = _default_compute_dtype()
    if not online:
        x = jnp.flip(x, axis=1)

    q = lambda a: a.astype(compute_dtype).astype(jnp.float32)
    w_ir, w_iz, w_in = q(params["w_ir"]), q(params["w_iz"]), q(params["w_in"])
    w_hr, w_hz, w_hn = q(params["w_hr"]), q(params["w_hz"]), q(params["w_hn"])
    w_lin = q(params["w_lin"])
    b_ir, b_iz, b_in = params["b_ir"], params["b_iz"], params["b_in"]
    b_hr, b_hz, b_hn = params["b_hr"], params["b_hz"], params["b_hn"]

    B = x.shape[0]
    H = params["w_hr"].shape[0]

    def step(h, x_t):
        x_q = q(x_t)
        h_q = q(h)
        r = jax.nn.sigmoid(x_q @ w_ir + b_ir + h_q @ w_hr + b_hr)
        z = jax.nn.sigmoid(x_q @ w_iz + b_iz + h_q @ w_hz + b_hz)
        n = jnp.tanh(x_q @ w_in + b_in + r * (h_q @ w_hn + b_hn))
        h_new = (1.0 - z) * n + z * h
        return h_new, h_new

    h0 = jnp.zeros((B, H), jnp.float32)
    _, hs = jax.lax.scan(step, h0, jnp.transpose(x, (1, 0, 2)))
    out = hs @ w_lin + params["b_lin"]
    out = jnp.transpose(out, (1, 0, 2))
    if not online:
        out = jnp.flip(out, axis=1)
    return out


if __name__ == "__main__":
    B, T, I, H, O = 2, 8, 4, 32, 16
    key = jax.random.PRNGKey(0)
    k_x, k_p = jax.random.split(key)

    x = jax.random.normal(k_x, (B, T, I), jnp.float32)
    params = init_params(k_p, I, H, O)

    cdt = _default_compute_dtype()
    tol = 2e-2 if jnp.dtype(cdt) == jnp.dtype(jnp.bfloat16) else 1e-4

    # offline (time-reversed) path; tt=3 exercises the ragged-tail padding
    out = jax.block_until_ready(gru_encoder_forward(x, params, online=False, tt=3))
    ref = jax.block_until_ready(gru_encoder_ref(x, params, online=False))
    assert out.shape == (B, T, O)
    assert jnp.allclose(out, ref, atol=tol, rtol=tol), "offline mismatch vs reference"

    # online (causal) path; tt=4 tiles T exactly
    out_on = jax.block_until_ready(gru_encoder_forward(x, params, online=True, tt=4))
    ref_on = jax.block_until_ready(gru_encoder_ref(x, params, online=True))
    assert jnp.allclose(out_on, ref_on, atol=tol, rtol=tol), "online mismatch vs reference"

    print("KERNEL_OK")
</pallas_src>

<mosaic_0001>
module attributes {stable_mosaic.version = 11 : i64} {
  func.func @_gru_recurrence_kernel(%arg0: i32, %arg1: i32, %arg2: memref<3x8x384xf32, #tpu.memory_space<vmem>>, %arg3: memref<128x384xf32, #tpu.memory_space<vmem>>, %arg4: memref<1x128xf32, #tpu.memory_space<vmem>>, %arg5: memref<3x8x128xf32, #tpu.memory_space<vmem>>, %arg6: memref<8x128xf32, #tpu.memory_space<vmem>>) attributes {dimension_semantics = [#tpu.dimension_semantics<parallel>, #tpu.dimension_semantics<arbitrary>], iteration_bounds = array<i64: 1, 3>, scalar_prefetch = 0 : i64, scratch_operands = 1 : i64, tpu.core_type = #tpu.core_type<tc>, window_params = [{transform_indices = @transform_0, window_bounds = array<i64: 3, 8, 384>}, {pipeline_mode = #tpu.pipeline_mode<synchronous>, transform_indices = @transform_1, window_bounds = array<i64: 128, 384>}, {pipeline_mode = #tpu.pipeline_mode<synchronous>, transform_indices = @transform_2, window_bounds = array<i64: 1, 128>}, {transform_indices = @transform_3, window_bounds = array<i64: 3, 8, 128>}]} {
    %c0_i32 = arith.constant 0 : i32
    %0 = arith.cmpi eq, %arg1, %c0_i32 : i32
    %1 = arith.extui %0 : i1 to i32
    %c0_i32_0 = arith.constant 0 : i32
    %2 = arith.cmpi ne, %1, %c0_i32_0 : i32
    scf.if %2 {
      %cst_35 = arith.constant 0.000000e+00 : f32
      %117 = vector.broadcast %cst_35 : f32 to vector<8x128xf32>
      %c0_36 = arith.constant 0 : index
      %c0_37 = arith.constant 0 : index
      %118 = vector.load %arg6[%c0_36, %c0_37] : memref<8x128xf32, #tpu.memory_space<vmem>>, vector<8x128xf32>
      tpu.vector_store %arg6[%c0_36, %c0_37], %117 {strides = array<i32>} : memref<8x128xf32, #tpu.memory_space<vmem>>, vector<8x128xf32>,
    } else {
    }
    %c0 = arith.constant 0 : index
    %c0_1 = arith.constant 0 : index
    %3 = vector.load %arg3[%c0, %c0_1] : memref<128x384xf32, #tpu.memory_space<vmem>>, vector<128x384xf32>
    %c0_2 = arith.constant 0 : index
    %c0_3 = arith.constant 0 : index
    %4 = vector.load %arg4[%c0_2, %c0_3] : memref<1x128xf32, #tpu.memory_space<vmem>>, vector<1x128xf32>
    %5 = vector.shape_cast %4 : vector<1x128xf32> to vector<1x128xf32>
    %6 = vector.broadcast %5 : vector<1x128xf32> to vector<8x128xf32>
    %c0_4 = arith.constant 0 : index
    %c0_5 = arith.constant 0 : index
    %7 = vector.load %arg6[%c0_4, %c0_5] : memref<8x128xf32, #tpu.memory_space<vmem>>, vector<8x128xf32>
    %c0_i32_6 = arith.constant 0 : i32
    %c2_i32 = arith.constant 2 : i32
    %8 = arith.subi %c2_i32, %c0_i32_6 : i32
    %9 = arith.index_cast %8 : i32 to index
    %c0_7 = arith.constant 0 : index
    %c0_8 = arith.constant 0 : index
    %10 = vector.load %arg2[%9, %c0_7, %c0_8] : memref<3x8x384xf32, #tpu.memory_space<vmem>>, vector<1x8x384xf32>
    %11 = vector.shape_cast %10 : vector<1x8x384xf32> to vector<8x384xf32>
    %cst = arith.constant dense<0.000000e+00> : vector<8x384xf32>
    %12 = tpu.matmul %7, %3, %cst {dimension_numbers = #tpu.dot_dimension_numbers<[1], [0], [0], [1], [0, 0, 1, 1], [], []>} : vector<8x128xf32>, vector<128x384xf32>, vector<8x384xf32> -> vector<8x384xf32>
    %13 = vector.extract_strided_slice %11 {offsets = [0, 0], sizes = [8, 128], strides = [1, 1]} : vector<8x384xf32> to vector<8x128xf32>
    %14 = vector.extract_strided_slice %12 {offsets = [0, 0], sizes = [8, 128], strides = [1, 1]} : vector<8x384xf32> to vector<8x128xf32>
    %15 = arith.addf %13, %14 : vector<8x128xf32>
    %16 = arith.negf %15 : vector<8x128xf32>
    %17 = math.exp %16 : vector<8x128xf32>
    %cst_9 = arith.constant 1.000000e+00 : f32
    %18 = vector.broadcast %cst_9 : f32 to vector<8x128xf32>
    %19 = arith.addf %18, %17 : vector<8x128xf32>
    %20 = arith.divf %18, %19 : vector<8x128xf32>
    %21 = vector.extract_strided_slice %11 {offsets = [0, 128], sizes = [8, 128], strides = [1, 1]} : vector<8x384xf32> to vector<8x128xf32>
    %22 = vector.extract_strided_slice %12 {offsets = [0, 128], sizes = [8, 128], strides = [1, 1]} : vector<8x384xf32> to vector<8x128xf32>
    %23 = arith.addf %21, %22 : vector<8x128xf32>
    %24 = arith.negf %23 : vector<8x128xf32>
    %25 = math.exp %24 : vector<8x128xf32>
    %cst_10 = arith.constant 1.000000e+00 : f32
    %26 = vector.broadcast %cst_10 : f32 to vector<8x128xf32>
    %27 = arith.addf %26, %25 : vector<8x128xf32>
    %28 = arith.divf %26, %27 : vector<8x128xf32>
    %29 = vector.extract_strided_slice %11 {offsets = [0, 256], sizes = [8, 128], strides = [1, 1]} : vector<8x384xf32> to vector<8x128xf32>
    %30 = vector.extract_strided_slice %12 {offsets = [0, 256], sizes = [8, 128], strides = [1, 1]} : vector<8x384xf32> to vector<8x128xf32>
    %31 = arith.addf %30, %6 : vector<8x128xf32>
    %32 = arith.mulf %20, %31 : vector<8x128xf32>
    %33 = arith.addf %29, %32 : vector<8x128xf32>
    %34 = math.tanh %33 : vector<8x128xf32>
    %cst_11 = arith.constant 1.000000e+00 : f32
    %35 = vector.broadcast %cst_11 : f32 to vector<8x128xf32>
    %36 = arith.subf %35, %28 : vector<8x128xf32>
    %37 = arith.mulf %36, %34 : vector<8x128xf32>
    %38 = arith.mulf %28, %7 : vector<8x128xf32>
    %39 = arith.addf %37, %38 : vector<8x128xf32>
    %40 = arith.index_cast %8 : i32 to index
    %c0_12 = arith.constant 0 : index
    %c0_13 = arith.constant 0 : index
    %41 = vector.load %arg5[%40, %c0_12, %c0_13] : memref<3x8x128xf32, #tpu.memory_space<vmem>>, vector<1x8x128xf32>
    %42 = vector.shape_cast %41 : vector<1x8x128xf32> to vector<8x128xf32>
    %43 = vector.shape_cast %39 : vector<8x128xf32> to vector<1x8x128xf32>
    tpu.vector_store %arg5[%40, %c0_12, %c0_13], %43 {strides = array<i32>} : memref<3x8x128xf32, #tpu.memory_space<vmem>>, vector<1x8x128xf32>,
    %c1_i32 = arith.constant 1 : i32
    %c2_i32_14 = arith.constant 2 : i32
    %44 = arith.subi %c2_i32_14, %c1_i32 : i32
    %45 = arith.index_cast %44 : i32 to index
    %c0_15 = arith.constant 0 : index
    %c0_16 = arith.constant 0 : index
    %46 = vector.load %arg2[%45, %c0_15, %c0_16] : memref<3x8x384xf32, #tpu.memory_space<vmem>>, vector<1x8x384xf32>
    %47 = vector.shape_cast %46 : vector<1x8x384xf32> to vector<8x384xf32>
    %cst_17 = arith.constant dense<0.000000e+00> : vector<8x384xf32>
    %48 = tpu.matmul %39, %3, %cst_17 {dimension_numbers = #tpu.dot_dimension_numbers<[1], [0], [0], [1], [0, 0, 1, 1], [], []>} : vector<8x128xf32>, vector<128x384xf32>, vector<8x384xf32> -> vector<8x384xf32>
    %49 = vector.extract_strided_slice %47 {offsets = [0, 0], sizes = [8, 128], strides = [1, 1]} : vector<8x384xf32> to vector<8x128xf32>
    %50 = vector.extract_strided_slice %48 {offsets = [0, 0], sizes = [8, 128], strides = [1, 1]} : vector<8x384xf32> to vector<8x128xf32>
    %51 = arith.addf %49, %50 : vector<8x128xf32>
    %52 = arith.negf %51 : vector<8x128xf32>
    %53 = math.exp %52 : vector<8x128xf32>
    %cst_18 = arith.constant 1.000000e+00 : f32
    %54 = vector.broadcast %cst_18 : f32 to vector<8x128xf32>
    %55 = arith.addf %54, %53 : vector<8x128xf32>
    %56 = arith.divf %54, %55 : vector<8x128xf32>
    %57 = vector.extract_strided_slice %47 {offsets = [0, 128], sizes = [8, 128], strides = [1, 1]} : vector<8x384xf32> to vector<8x128xf32>
    %58 = vector.extract_strided_slice %48 {offsets = [0, 128], sizes = [8, 128], strides = [1, 1]} : vector<8x384xf32> to vector<8x128xf32>
    %59 = arith.addf %57, %58 : vector<8x128xf32>
    %60 = arith.negf %59 : vector<8x128xf32>
    %61 = math.exp %60 : vector<8x128xf32>
    %cst_19 = arith.constant 1.000000e+00 : f32
    %62 = vector.broadcast %cst_19 : f32 to vector<8x128xf32>
    %63 = arith.addf %62, %61 : vector<8x128xf32>
    %64 = arith.divf %62, %63 : vector<8x128xf32>
    %65 = vector.extract_strided_slice %47 {offsets = [0, 256], sizes = [8, 128], strides = [1, 1]} : vector<8x384xf32> to vector<8x128xf32>
    %66 = vector.extract_strided_slice %48 {offsets = [0, 256], sizes = [8, 128], strides = [1, 1]} : vector<8x384xf32> to vector<8x128xf32>
    %67 = arith.addf %66, %6 : vector<8x128xf32>
    %68 = arith.mulf %56, %67 : vector<8x128xf32>
    %69 = arith.addf %65, %68 : vector<8x128xf32>
    %70 = math.tanh %69 : vector<8x128xf32>
    %cst_20 = arith.constant 1.000000e+00 : f32
    %71 = vector.broadcast %cst_20 : f32 to vector<8x128xf32>
    %72 = arith.subf %71, %64 : vector<8x128xf32>
    %73 = arith.mulf %72, %70 : vector<8x128xf32>
    %74 = arith.mulf %64, %39 : vector<8x128xf32>
    %75 = arith.addf %73, %74 : vector<8x128xf32>
    %76 = arith.index_cast %44 : i32 to index
    %c0_21 = arith.constant 0 : index
    %c0_22 = arith.constant 0 : index
    %77 = vector.load %arg5[%76, %c0_21, %c0_22] : memref<3x8x128xf32, #tpu.memory_space<vmem>>, vector<1x8x128xf32>
    %78 = vector.shape_cast %77 : vector<1x8x128xf32> to vector<8x128xf32>
    %79 = vector.shape_cast %75 : vector<8x128xf32> to vector<1x8x128xf32>
    tpu.vector_store %arg5[%76, %c0_21, %c0_22], %79 {strides = array<i32>} : memref<3x8x128xf32, #tpu.memory_space<vmem>>, vector<1x8x128xf32>,
    %c2_i32_23 = arith.constant 2 : i32
    %c2_i32_24 = arith.constant 2 : i32
    %80 = arith.subi %c2_i32_24, %c2_i32_23 : i32
    %81 = arith.index_cast %80 : i32 to index
    %c0_25 = arith.constant 0 : index
    %c0_26 = arith.constant 0 : index
    %82 = vector.load %arg2[%81, %c0_25, %c0_26] : memref<3x8x384xf32, #tpu.memory_space<vmem>>, vector<1x8x384xf32>
    %83 = vector.shape_cast %82 : vector<1x8x384xf32> to vector<8x384xf32>
    %cst_27 = arith.constant dense<0.000000e+00> : vector<8x384xf32>
    %84 = tpu.matmul %75, %3, %cst_27 {dimension_numbers = #tpu.dot_dimension_numbers<[1], [0], [0], [1], [0, 0, 1, 1], [], []>} : vector<8x128xf32>, vector<128x384xf32>, vector<8x384xf32> -> vector<8x384xf32>
    %85 = vector.extract_strided_slice %83 {offsets = [0, 0], sizes = [8, 128], strides = [1, 1]} : vector<8x384xf32> to vector<8x128xf32>
    %86 = vector.extract_strided_slice %84 {offsets = [0, 0], sizes = [8, 128], strides = [1, 1]} : vector<8x384xf32> to vector<8x128xf32>
    %87 = arith.addf %85, %86 : vector<8x128xf32>
    %88 = arith.negf %87 : vector<8x128xf32>
    %89 = math.exp %88 : vector<8x128xf32>
    %cst_28 = arith.constant 1.000000e+00 : f32
    %90 = vector.broadcast %cst_28 : f32 to vector<8x128xf32>
    %91 = arith.addf %90, %89 : vector<8x128xf32>
    %92 = arith.divf %90, %91 : vector<8x128xf32>
    %93 = vector.extract_strided_slice %83 {offsets = [0, 128], sizes = [8, 128], strides = [1, 1]} : vector<8x384xf32> to vector<8x128xf32>
    %94 = vector.extract_strided_slice %84 {offsets = [0, 128], sizes = [8, 128], strides = [1, 1]} : vector<8x384xf32> to vector<8x128xf32>
    %95 = arith.addf %93, %94 : vector<8x128xf32>
    %96 = arith.negf %95 : vector<8x128xf32>
    %97 = math.exp %96 : vector<8x128xf32>
    %cst_29 = arith.constant 1.000000e+00 : f32
    %98 = vector.broadcast %cst_29 : f32 to vector<8x128xf32>
    %99 = arith.addf %98, %97 : vector<8x128xf32>
    %100 = arith.divf %98, %99 : vector<8x128xf32>
    %101 = vector.extract_strided_slice %83 {offsets = [0, 256], sizes = [8, 128], strides = [1, 1]} : vector<8x384xf32> to vector<8x128xf32>
    %102 = vector.extract_strided_slice %84 {offsets = [0, 256], sizes = [8, 128], strides = [1, 1]} : vector<8x384xf32> to vector<8x128xf32>
    %103 = arith.addf %102, %6 : vector<8x128xf32>
    %104 = arith.mulf %92, %103 : vector<8x128xf32>
    %105 = arith.addf %101, %104 : vector<8x128xf32>
    %106 = math.tanh %105 : vector<8x128xf32>
    %cst_30 = arith.constant 1.000000e+00 : f32
    %107 = vector.broadcast %cst_30 : f32 to vector<8x128xf32>
    %108 = arith.subf %107, %100 : vector<8x128xf32>
    %109 = arith.mulf %108, %106 : vector<8x128xf32>
    %110 = arith.mulf %100, %75 : vector<8x128xf32>
    %111 = arith.addf %109, %110 : vector<8x128xf32>
    %112 = arith.index_cast %80 : i32 to index
    %c0_31 = arith.constant 0 : index
    %c0_32 = arith.constant 0 : index
    %113 = vector.load %arg5[%112, %c0_31, %c0_32] : memref<3x8x128xf32, #tpu.memory_space<vmem>>, vector<1x8x128xf32>
    %114 = vector.shape_cast %113 : vector<1x8x128xf32> to vector<8x128xf32>
    %115 = vector.shape_cast %111 : vector<8x128xf32> to vector<1x8x128xf32>
    tpu.vector_store %arg5[%112, %c0_31, %c0_32], %115 {strides = array<i32>} : memref<3x8x128xf32, #tpu.memory_space<vmem>>, vector<1x8x128xf32>,
    %c3_i32 = arith.constant 3 : i32
    %c0_33 = arith.constant 0 : index
    %c0_34 = arith.constant 0 : index
    %116 = vector.load %arg6[%c0_33, %c0_34] : memref<8x128xf32, #tpu.memory_space<vmem>>, vector<8x128xf32>
    tpu.vector_store %arg6[%c0_33, %c0_34], %111 {strides = array<i32>} : memref<8x128xf32, #tpu.memory_space<vmem>>, vector<8x128xf32>,
    return
  }
  func.func @transform_0(%arg0: i32, %arg1: i32) -> (i32, i32, i32) {
    %c2_i32 = arith.constant 2 : i32
    %0 = arith.subi %c2_i32, %arg1 : i32
    %c0_i32 = arith.constant 0 : i32
    %c0_i32_0 = arith.constant 0 : i32
    return %0, %arg0, %c0_i32 : i32, i32, i32
  }
  func.func @transform_1(%arg0: i32, %arg1: i32) -> (i32, i32) {
    %c0_i32 = arith.constant 0 : i32
    %c0_i32_0 = arith.constant 0 : i32
    %c0_i32_1 = arith.constant 0 : i32
    return %c0_i32, %c0_i32_0 : i32, i32
  }
  func.func @transform_2(%arg0: i32, %arg1: i32) -> (i32, i32) {
    %c0_i32 = arith.constant 0 : i32
    %c0_i32_0 = arith.constant 0 : i32
    %c0_i32_1 = arith.constant 0 : i32
    return %c0_i32, %c0_i32_0 : i32, i32
  }
  func.func @transform_3(%arg0: i32, %arg1: i32) -> (i32, i32, i32) {
    %c2_i32 = arith.constant 2 : i32
    %0 = arith.subi %c2_i32, %arg1 : i32
    %c0_i32 = arith.constant 0 : i32
    %c0_i32_0 = arith.constant 0 : i32
    return %0, %arg0, %c0_i32 : i32, i32, i32
  }
}

</mosaic_0001>

<llo_original>
// kernel: tpu_custom_call.1
$region0: #{tpu_custom_call.1}
  #allocation0 [shape = 'u32[]', space=smem, size = 0x4, offset = 0x4, fixed_abs, tag = 'smem constant byte address 0x4 - core index']
  #allocation1 [shape = 'u32[144,128]{1,0:T(1,128)}', space=vmem, size = 0x12000, scoped, tag = 'internal scratch']
  #allocation2 [shape = 'f32[8,128]{1,0:T(8,128)}', space=vmem, size = 0x1000, scoped, tag = 'scratch operand']
  %s0 = inlined_call_operand.hbm [shape: f32[9,8,384], index: 0, kind: input, shape index: {}]
  %s1 = inlined_call_operand.hbm [shape: f32[128,384], index: 1, kind: input, shape index: {}]
  %s2 = inlined_call_operand.vmem [shape: f32[1,128], index: 2, kind: input, shape index: {}]
  %s3 = inlined_call_operand.hbm [shape: f32[9,8,128], index: 3, kind: output, shape index: {}]
  %s4 = sld [smem:[#allocation0]]
  $region57: #{tpu_custom_call.1} parent=0
    _
  %s6 = ssub.s32 1, %s4
  %s7 = scalar_select 0, %s6, %s4
  $region1: #{tpu_custom_call.1} parent=0
    #allocation3 [shape = 'u8[73728]{0}', space=vmem, size = 0x12000, scoped, tag = 'input window, operand 0']
    #allocation4 [shape = 's32[2]{0}', space=sflag, size = 0x8, scoped, tag = 'scoped memory for tpu_custom_call.1']
    #allocation5 [shape = 's32[2]{0}', space=sflag, size = 0x8, scoped, tag = 'scoped memory for tpu_custom_call.1']
    #allocation6 [shape = 'u8[196608]{0}', space=vmem, size = 0x30000, scoped, tag = 'input window, operand 1, single buffered']
    #allocation7 [shape = 's32[1]{0}', space=sflag, size = 0x4, scoped, tag = 'scoped memory for tpu_custom_call.1']
    #allocation8 [shape = 'u8[24576]{0}', space=vmem, size = 0x6000, scoped, tag = 'output window, operand 0']
    %8 = vsyncpa [#allocation4], 0
    %s9 = scalar_lea.sflag [#allocation4], 1
    %10 = vsyncpa %s9, 0
    %11 = vsyncpa [#allocation7], 0
    %12 = vsyncpa [#allocation5], 0
    %s13 = scalar_lea.sflag [#allocation5], 1
    %14 = vsyncpa %s13, 0
    loop: start=0, step=1, limit=5
    $region2: #{tpu_custom_call.1} parent=1 // loop_pre_header
      _
    $region3: #{tpu_custom_call.1} parent=1 // loop_header
      %s16 = sphi 0, %s20
      %p17 = scmp.ge.s32.totalorder %s16, 5
      %s23 = sphi 0, %s35
      %s24 = sphi 0, %s31
      %s25 = sphi 0, %s23
      %s26 = sphi 0, %s24
      %s27 = sphi 0, %s25
      %s28 = sphi 0, %s26
      %s42 = sphi 0, %s44
      %s45 = sphi 0, %s42
      %s46 = sphi 0, %s45
      %s62 = sphi 0, %s46
      %s66 = sphi 0, %s66
      %s68 = sphi 0, %s66
      %s69 = sphi 0, %s68
      %s83 = sphi 0, %s69
      %s87 = sphi 0, %s87
      %s89 = sphi 0, %s87
      %s90 = sphi 0, %s89
      %s104 = sphi 0, %s90
      %s114 = sphi 0, %s116
      %s117 = sphi 0, %s114
      %s118 = sphi 0, %s117
      %s134 = sphi 0, %s118
    $region4: #{tpu_custom_call.1} parent=1 // loop_header_branch
      %19 = sbr.rel (%p17) target = $region8
    $region5: #{tpu_custom_call.1} parent=1 // loop_body
      %s21 = ssub.s32 %s16, 1
      %s22 = ssub.s32 %s16, 2
      %s29 = sadd.s32 1, %s24
      %p30 = scmp.ge.s32.totalorder %s29, 3
      %s31 = scalar_select %p30, 0, %s29
      %s32 = sadd.s32 1, %s23
      %s33 = scalar_select %p30, %s32, %s23
      %p34 = scmp.ge.s32.totalorder %s33, 1
      %s35 = scalar_select %p34, 0, %s33
      %s36 = ssub.s32 2, %s24
      %s37 = ssub.s32 2, %s31
      %s38 = ssub.s32 %s36, %s37
      %s39 = ssub.s32 %s23, %s35
      %s40 = sor.u32 %s38, %s39
      %p41 = scmp.eq.s32.totalorder %s40, 0
      %s43 = sadd.s32 %s42, 1
      %s44 = scalar_select %p41, %s42, %s43
      %p47 = pneg %p41
      %p48 = scmp.eq.s32.totalorder %s16, 2
      %p49 = por %p47, %p48
      %p50 = scmp.ne.s32.totalorder %s42, %s45
      %p51 = scmp.eq.s32.totalorder %s16, 0
      %p52 = por %p50, %p51
      %p53 = scmp.ne.s32.totalorder %s42, %s45
      %p54 = scmp.eq.s32.totalorder %s21, 2
      %p55 = por %p53, %p54
      %p56 = scmp.ne.s32.totalorder %s45, %s46
      %p57 = scmp.eq.s32.totalorder %s21, 0
      %p58 = por %p56, %p57
      %p59 = scmp.ne.s32.totalorder %s45, %s46
      %p60 = scmp.eq.s32.totalorder %s22, 2
      %p61 = por %p59, %p60
      %p63 = scmp.ne.s32.totalorder %s46, %s62
      %p64 = scmp.eq.s32.totalorder %s22, 0
      %p65 = por %p63, %p64
      %s67 = sadd.s32 %s66, 1
      %p70 = scmp.eq.s32.totalorder %s16, 2
      %p71 = scmp.ne.s32.totalorder %s66, %s68
      %p72 = scmp.eq.s32.totalorder %s16, 0
      %p73 = por %p71, %p72
      %p74 = scmp.ne.s32.totalorder %s66, %s68
      %p75 = scmp.eq.s32.totalorder %s21, 2
      %p76 = por %p74, %p75
      %p77 = scmp.ne.s32.totalorder %s68, %s69
      %p78 = scmp.eq.s32.totalorder %s21, 0
      %p79 = por %p77, %p78
      %p80 = scmp.ne.s32.totalorder %s68, %s69
      %p81 = scmp.eq.s32.totalorder %s22, 2
      %p82 = por %p80, %p81
      %p84 = scmp.ne.s32.totalorder %s69, %s83
      %p85 = scmp.eq.s32.totalorder %s22, 0
      %p86 = por %p84, %p85
      %s88 = sadd.s32 %s87, 1
      %p91 = scmp.eq.s32.totalorder %s16, 2
      %p92 = scmp.ne.s32.totalorder %s87, %s89
      %p93 = scmp.eq.s32.totalorder %s16, 0
      %p94 = por %p92, %p93
      %p95 = scmp.ne.s32.totalorder %s87, %s89
      %p96 = scmp.eq.s32.totalorder %s21, 2
      %p97 = por %p95, %p96
      %p98 = scmp.ne.s32.totalorder %s89, %s90
      %p99 = scmp.eq.s32.totalorder %s21, 0
      %p100 = por %p98, %p99
      %p101 = scmp.ne.s32.totalorder %s89, %s90
      %p102 = scmp.eq.s32.totalorder %s22, 2
      %p103 = por %p101, %p102
      %p105 = scmp.ne.s32.totalorder %s90, %s104
      %p106 = scmp.eq.s32.totalorder %s22, 0
      %p107 = por %p105, %p106
      %s108 = ssub.s32 2, %s24
      %s109 = ssub.s32 2, %s31
      %s110 = ssub.s32 %s108, %s109
      %s111 = ssub.s32 %s23, %s35
      %s112 = sor.u32 %s110, %s111
      %p113 = scmp.eq.s32.totalorder %s112, 0
      %s115 = sadd.s32 %s114, 1
      %s116 = scalar_select %p113, %s114, %s115
      %p119 = pneg %p113
      %p120 = scmp.eq.s32.totalorder %s16, 2
      %p121 = por %p119, %p120
      %p122 = scmp.ne.s32.totalorder %s114, %s117
      %p123 = scmp.eq.s32.totalorder %s16, 0
      %p124 = por %p122, %p123
      %p125 = scmp.ne.s32.totalorder %s114, %s117
      %p126 = scmp.eq.s32.totalorder %s21, 2
      %p127 = por %p125, %p126
      %p128 = scmp.ne.s32.totalorder %s117, %s118
      %p129 = scmp.eq.s32.totalorder %s21, 0
      %p130 = por %p128, %p129
      %p131 = scmp.ne.s32.totalorder %s117, %s118
      %p132 = scmp.eq.s32.totalorder %s22, 2
      %p133 = por %p131, %p132
      %p135 = scmp.ne.s32.totalorder %s118, %s134
      %p136 = scmp.eq.s32.totalorder %s22, 0
      %p137 = por %p135, %p136
      %p138 = scmp.le.s32.totalorder 1, %s16
      %p139 = scmp.lt.s32.totalorder %s16, 4
      %p140 = pnand %p138, %p139
      %p141 = pneg %p140
      // Predicated region
      $region9: #{tpu_custom_call.1} parent=5 // pred_check
        _
      $region10: #{tpu_custom_call.1} parent=5 // pred_check_branch
        %143 = sbr.rel (%p140) target = $region12
      $region11: #{tpu_custom_call.1} parent=5 // pred_region
        %s144 = ssub.s32 %s16, 1
        // Predicated region
        $region13: #{tpu_custom_call.1} parent=11 // pred_check
          %p145 = pneg %p79
        $region14: #{tpu_custom_call.1} parent=11 // pred_check_branch
          %147 = sbr.rel (%p145) target = $region16
        $region15: #{tpu_custom_call.1} parent=11 // pred_region
          %s149 = ssub.s32 6144, 6144
          %150 = vsyncadd [#allocation7], %s149
          %s151 = sshll.u32 [#allocation6], 4
          %s152 = int_to_ptr.vmem [resolvable:$true] %s151
          %157 = dma.hbm_to_vmem [thread:$0]  %s1, 6144, %s152, [#allocation7], 384, 384, 24
        $region16: #{tpu_custom_call.1} parent=11 // pred_fallthru
          _
        // Predicated region
        $region17: #{tpu_custom_call.1} parent=11 // pred_check
          %p158 = pneg %p100
        $region18: #{tpu_custom_call.1} parent=11 // pred_check_branch
          %160 = sbr.rel (%p158) target = $region20
        $region19: #{tpu_custom_call.1} parent=11 // pred_region
          _
        $region20: #{tpu_custom_call.1} parent=11 // pred_fallthru
          _
      $region12: #{tpu_custom_call.1} parent=5 // pred_fallthru
        _
      %p161 = scmp.lt.s32.totalorder %s16, 3
      // Predicated region
      $region21: #{tpu_custom_call.1} parent=5 // pred_check
        %p162 = pneg %p161
      $region22: #{tpu_custom_call.1} parent=5 // pred_check_branch
        %164 = sbr.rel (%p162) target = $region24
      $region23: #{tpu_custom_call.1} parent=5 // pred_region
        // Predicated region
        $region25: #{tpu_custom_call.1} parent=23 // pred_check
          %p165 = pneg %p52
        $region26: #{tpu_custom_call.1} parent=23 // pred_check_branch
          %167 = sbr.rel (%p165) target = $region28
        $region27: #{tpu_custom_call.1} parent=23 // pred_region
          %s168 = sand.u32 %s42, 1
          %s169 = scalar_lea.sflag [#allocation4], %s168
          %s170 = sand.u32 %s42, 1
          %s171 = smul.addr %s170, 72
          %s172 = scalar_lea.vmem [#allocation3], %s171
          %s173 = ssub.s32 2, %s24
          %s174 = smul.u32 3, %s173
          %s176 = ssub.s32 1152, 1152
          %177 = vsyncadd %s169, %s176
          %s178 = smul.addr %s23, 3
          %s179 = smul.addr %s174, 3
          %s180 = sadd.s32 %s178, %s179
          %s181 = smul.addr %s180, 128
          %s182 = scalar_lea.hbm %s0, %s181
          %s183 = sshll.u32 %s172, 4
          %s184 = int_to_ptr.vmem [resolvable:$true] %s183
          %189 = dma.hbm_to_vmem [thread:$0]  %s182, 1152, %s184, %s169, 384, 384, 24
        $region28: #{tpu_custom_call.1} parent=23 // pred_fallthru
          _
      $region24: #{tpu_custom_call.1} parent=5 // pred_fallthru
        _
      %p190 = scmp.le.s32.totalorder 1, %s16
      %p191 = scmp.lt.s32.totalorder %s16, 4
      %p192 = pnand %p190, %p191
      %p193 = pneg %p192
      // Predicated region
      $region29: #{tpu_custom_call.1} parent=5 // pred_check
        _
      $region30: #{tpu_custom_call.1} parent=5 // pred_check_branch
        %195 = sbr.rel (%p192) target = $region32
      $region31: #{tpu_custom_call.1} parent=5 // pred_region
        %s196 = ssub.s32 %s16, 1
        %s197 = sand.u32 %s45, 1
        %s198 = scalar_lea.sflag [#allocation4], %s197
        %s199 = sand.u32 %s45, 1
        %s200 = smul.addr %s199, 72
        %s201 = scalar_lea.vmem [#allocation3], %s200
        // Predicated region
        $region33: #{tpu_custom_call.1} parent=31 // pred_check
          %p202 = pneg %p58
        $region34: #{tpu_custom_call.1} parent=31 // pred_check_branch
          %204 = sbr.rel (%p202) target = $region36
        $region35: #{tpu_custom_call.1} parent=31 // pred_region
          %205 = dma.done %s198, 1152
        $region36: #{tpu_custom_call.1} parent=31 // pred_fallthru
          _
        // Predicated region
        $region37: #{tpu_custom_call.1} parent=31 // pred_check
          %p206 = pneg %p79
        $region38: #{tpu_custom_call.1} parent=31 // pred_check_branch
          %208 = sbr.rel (%p206) target = $region40
        $region39: #{tpu_custom_call.1} parent=31 // pred_region
          %209 = dma.done [#allocation7], 6144
        $region40: #{tpu_custom_call.1} parent=31 // pred_fallthru
          _
        %s210 = sand.u32 %s45, 1
        %s211 = scalar_lea.sflag [#allocation4], %s210
        %s212 = sand.u32 %s45, 1
        %s213 = smul.addr %s212, 72
        %s214 = scalar_lea.vmem [#allocation3], %s213
        %p215 = pneg %p58
        %p216 = pneg %p55
        %p217 = pneg %p79
        %p218 = pneg %p76
        %p219 = pneg %p100
        %p220 = pneg %p97
        %p221 = pneg %p130
        %p222 = pneg %p127
        %s223 = sand.u32 %s117, 1
        %s224 = scalar_lea.sflag [#allocation5], %s223
        %s225 = sand.u32 %s117, 1
        %s226 = smul.addr %s225, 24
        %s227 = scalar_lea.vmem [#allocation8], %s226
        %s228 = ssub.s32 2, %s26
        %s229 = smul.u32 3, %s228
        %s230 = ssub.s32 2, %s26
        %s231 = smul.u32 3, %s230
        %p232 = scmp.eq.s32.totalorder %s26, 0
        // Predicated region
        $region41: #{tpu_custom_call.1} parent=31 // pred_check
          %p233 = pneg %p232
        $region42: #{tpu_custom_call.1} parent=31 // pred_check_branch
          %235 = sbr.rel (%p233) target = $region44
        $region43: #{tpu_custom_call.1} parent=31 // pred_region
          %236 = vst [vmem:[#allocation2] sm:$0xff] 0.0
        $region44: #{tpu_custom_call.1} parent=31 // pred_fallthru
          _
        %v237 = vld [vmem:[#allocation6] sm:$0xff]
        %v238 = vld [vmem:[#allocation6 + $0x8] sm:$0xff]
        %v239 = vld [vmem:[#allocation6 + $0x10] sm:$0xff]
        %v240 = vld [vmem:[#allocation6 + $0x18] sm:$0xff]
        %v241 = vld [vmem:[#allocation6 + $0x20] sm:$0xff]
        %v242 = vld [vmem:[#allocation6 + $0x28] sm:$0xff]
        %v243 = vld [vmem:[#allocation6 + $0x30] sm:$0xff]
        %v244 = vld [vmem:[#allocation6 + $0x38] sm:$0xff]
        %v245 = vld [vmem:[#allocation6 + $0x40] sm:$0xff]
        %v246 = vld [vmem:[#allocation6 + $0x48] sm:$0xff]
        %v247 = vld [vmem:[#allocation6 + $0x50] sm:$0xff]
        %v248 = vld [vmem:[#allocation6 + $0x58] sm:$0xff]
        %v249 = vld [vmem:[#allocation6 + $0x60] sm:$0xff]
        %v250 = vld [vmem:[#allocation6 + $0x68] sm:$0xff]
        %v251 = vld [vmem:[#allocation6 + $0x70] sm:$0xff]
        %v252 = vld [vmem:[#allocation6 + $0x78] sm:$0xff]
        %v253 = vld [vmem:[#allocation6 + $0x80] sm:$0xff]
        %v254 = vld [vmem:[#allocation6 + $0x88] sm:$0xff]
        %v255 = vld [vmem:[#allocation6 + $0x90] sm:$0xff]
        %v256 = vld [vmem:[#allocation6 + $0x98] sm:$0xff]
        %v257 = vld [vmem:[#allocation6 + $0xa0] sm:$0xff]
        %v258 = vld [vmem:[#allocation6 + $0xa8] sm:$0xff]
        %v259 = vld [vmem:[#allocation6 + $0xb0] sm:$0xff]
        %v260 = vld [vmem:[#allocation6 + $0xb8] sm:$0xff]
        %v261 = vld [vmem:[#allocation6 + $0xc0] sm:$0xff]
        %v262 = vld [vmem:[#allocation6 + $0xc8] sm:$0xff]
        %v263 = vld [vmem:[#allocation6 + $0xd0] sm:$0xff]
        %v264 = vld [vmem:[#allocation6 + $0xd8] sm:$0xff]
        %v265 = vld [vmem:[#allocation6 + $0xe0] sm:$0xff]
        %v266 = vld [vmem:[#allocation6 + $0xe8] sm:$0xff]
        %v267 = vld [vmem:[#allocation6 + $0xf0] sm:$0xff]
        %v268 = vld [vmem:[#allocation6 + $0xf8] sm:$0xff]
        %v269 = vld [vmem:[#allocation6 + $0x100] sm:$0xff]
        %v270 = vld [vmem:[#allocation6 + $0x108] sm:$0xff]
        %v271 = vld [vmem:[#allocation6 + $0x110] sm:$0xff]
        %v272 = vld [vmem:[#allocation6 + $0x118] sm:$0xff]
        %v273 = vld [vmem:[#allocation6 + $0x120] sm:$0xff]
        %v274 = vld [vmem:[#allocation6 + $0x128] sm:$0xff]
        %v275 = vld [vmem:[#allocation6 + $0x130] sm:$0xff]
        %v276 = vld [vmem:[#allocation6 + $0x138] sm:$0xff]
        %v277 = vld [vmem:[#allocation6 + $0x140] sm:$0xff]
        %v278 = vld [vmem:[#allocation6 + $0x148] sm:$0xff]
        %v279 = vld [vmem:[#allocation6 + $0x150] sm:$0xff]
        %v280 = vld [vmem:[#allocation6 + $0x158] sm:$0xff]
        %v281 = vld [vmem:[#allocation6 + $0x160] sm:$0xff]
        %v282 = vld [vmem:[#allocation6 + $0x168] sm:$0xff]
        %v283 = vld [vmem:[#allocation6 + $0x170] sm:$0xff]
        %v284 = vld [vmem:[#allocation6 + $0x178] sm:$0xff]
        %v285 = vld [vmem:[%s2] sm:$0x1]
        %v287 = vlaneseq
        %v288 = vshrl.u32 %v287, 7
        %v289 = vsub.s32 0, %v288
        %v290 = vrot.slane %v285, %v289
        %v292 = vld [vmem:[#allocation2] sm:$0xff]
        %s293 = scalar_lea.vmem %s201, 48 [#allocation3]
        %v294 = vld [vmem:[%s293] sm:$0xff]
        %v295 = vld [vmem:[%s293 + $0x8] sm:$0xff]
        %v296 = vld [vmem:[%s293 + $0x10] sm:$0xff]
        %297 = vmatprep.subr.mxu0 %v283
        %298 = vmatpush1.msra.mxu0 %v282
        %299 = vmatprep.subr.mxu0 %v280
        %300 = vmatpush1.msra.mxu0 %v279
        %301 = vmatprep.subr.mxu0 %v277
        %302 = vmatpush1.msra.mxu0 %v276
        %303 = vmatprep.subr.mxu0 %v274
        %304 = vmatpush1.msra.mxu0 %v273
        %305 = vmatprep.subr.mxu0 %v271
        %306 = vmatpush1.msra.mxu0 %v270
        %307 = vmatprep.subr.mxu0 %v268
        %308 = vmatpush1.msra.mxu0 %v267
        %309 = vmatprep.subr.mxu0 %v265
        %310 = vmatpush1.msra.mxu0 %v264
        %311 = vmatprep.subr.mxu0 %v262
        %312 = vmatpush1.msra.mxu0 %v261
        %313 = vmatprep.subr.mxu0 %v259
        %314 = vmatpush1.msra.mxu0 %v258
        %315 = vmatprep.subr.mxu0 %v256
        %316 = vmatpush1.msra.mxu0 %v255
        %317 = vmatprep.subr.mxu0 %v253
        %318 = vmatpush1.msra.mxu0 %v252
        %319 = vmatprep.subr.mxu0 %v250
        %320 = vmatpush1.msra.mxu0 %v249
        %321 = vmatprep.subr.mxu0 %v247
        %322 = vmatpush1.msra.mxu0 %v246
        %323 = vmatprep.subr.mxu0 %v244
        %324 = vmatpush1.msra.mxu0 %v243
        %325 = vmatprep.subr.mxu0 %v241
        %326 = vmatpush1.msra.mxu0 %v240
        %327 = vmatprep.subr.mxu0 %v238
        %328 = vmatpush1.msra.mxu0 %v237
        %329 = vmatprep.subr.mxu0 0.0
        %330 = vmatpush2.msra.mxu0 0.0
        %331 = vmatprep.subr.mxu0 0.0
        %332 = vmatpush2.msra.mxu0 0.0
        %333 = vmatprep.subr.mxu0 0.0
        %334 = vmatpush2.msra.mxu0 0.0
        %335 = vmatprep.subr.mxu0 0.0
        %336 = vmatpush2.msra.mxu0 0.0
        %337 = vmatprep.subr.mxu0 0.0
        %338 = vmatpush2.msra.mxu0 0.0
        %339 = vmatprep.subr.mxu0 0.0
        %340 = vmatpush2.msra.mxu0 0.0
        %341 = vmatprep.subr.mxu0 0.0
        %342 = vmatpush2.msra.mxu0 0.0
        %343 = vmatprep.subr.mxu0 0.0
        %344 = vmatpush2.msra.mxu0 0.0
        %345 = vmatprep.subr.mxu0 0.0
        %346 = vmatpush2.msra.mxu0 0.0
        %347 = vmatprep.subr.mxu0 0.0
        %348 = vmatpush2.msra.mxu0 0.0
        %349 = vmatprep.subr.mxu0 0.0
        %350 = vmatpush2.msra.mxu0 0.0
        %351 = vmatprep.subr.mxu0 0.0
        %352 = vmatpush2.msra.mxu0 0.0
        %353 = vmatprep.subr.mxu0 0.0
        %354 = vmatpush2.msra.mxu0 0.0
        %355 = vmatprep.subr.mxu0 0.0
        %356 = vmatpush2.msra.mxu0 0.0
        %357 = vmatprep.subr.mxu0 0.0
        %358 = vmatpush2.msra.mxu0 0.0
        %359 = vmatprep.subr.mxu0 0.0
        %360 = vmatpush2.msra.mxu0 0.0
        %361 = vmatprep.mubr.f32.mxu0 0.0
        %362 = vmatmul.mubr.f32.gmra.mxu0 %v292
        %v363 = vpop.f32.mrf.mxu0
        %v364 = vadd.f32 0.0, %v363
        %v365 = vpop.f32.mrf.mxu0
        %v366 = vadd.f32 0.0, %v365
        %367 = vdwg.mxu0
        %368 = vmatprep.subr.mxu0 0.0
        %369 = vmatpush1.msra.mxu0 %v284
        %370 = vmatprep.subr.mxu0 0.0
        %371 = vmatpush1.msra.mxu0 %v281
        %372 = vmatprep.subr.mxu0 0.0
        %373 = vmatpush1.msra.mxu0 %v278
        %374 = vmatprep.subr.mxu0 0.0
        %375 = vmatpush1.msra.mxu0 %v275
        %376 = vmatprep.subr.mxu0 0.0
        %377 = vmatpush1.msra.mxu0 %v272
        %378 = vmatprep.subr.mxu0 0.0
        %379 = vmatpush1.msra.mxu0 %v269
        %380 = vmatprep.subr.mxu0 0.0
        %381 = vmatpush1.msra.mxu0 %v266
        %382 = vmatprep.subr.mxu0 0.0
        %383 = vmatpush1.msra.mxu0 %v263
        %384 = vmatprep.subr.mxu0 0.0
        %385 = vmatpush1.msra.mxu0 %v260
        %386 = vmatprep.subr.mxu0 0.0
        %387 = vmatpush1.msra.mxu0 %v257
        %388 = vmatprep.subr.mxu0 0.0
        %389 = vmatpush1.msra.mxu0 %v254
        %390 = vmatprep.subr.mxu0 0.0
        %391 = vmatpush1.msra.mxu0 %v251
        %392 = vmatprep.subr.mxu0 0.0
        %393 = vmatpush1.msra.mxu0 %v248
        %394 = vmatprep.subr.mxu0 0.0
        %395 = vmatpush1.msra.mxu0 %v245
        %396 = vmatprep.subr.mxu0 0.0
        %397 = vmatpush1.msra.mxu0 %v242
        %398 = vmatprep.subr.mxu0 0.0
        %399 = vmatpush1.msra.mxu0 %v239
        %400 = vmatprep.subr.mxu0 0.0
        %401 = vmatpush2.msra.mxu0 0.0
        %402 = vmatprep.subr.mxu0 0.0
        %403 = vmatpush2.msra.mxu0 0.0
        %404 = vmatprep.subr.mxu0 0.0
        %405 = vmatpush2.msra.mxu0 0.0
        %406 = vmatprep.subr.mxu0 0.0
        %407 = vmatpush2.msra.mxu0 0.0
        %408 = vmatprep.subr.mxu0 0.0
        %409 = vmatpush2.msra.mxu0 0.0
        %410 = vmatprep.subr.mxu0 0.0
        %411 = vmatpush2.msra.mxu0 0.0
        %412 = vmatprep.subr.mxu0 0.0
        %413 = vmatpush2.msra.mxu0 0.0
        %414 = vmatprep.subr.mxu0 0.0
        %415 = vmatpush2.msra.mxu0 0.0
        %416 = vmatprep.subr.mxu0 0.0
        %417 = vmatpush2.msra.mxu0 0.0
        %418 = vmatprep.subr.mxu0 0.0
        %419 = vmatpush2.msra.mxu0 0.0
        %420 = vmatprep.subr.mxu0 0.0
        %421 = vmatpush2.msra.mxu0 0.0
        %422 = vmatprep.subr.mxu0 0.0
        %423 = vmatpush2.msra.mxu0 0.0
        %424 = vmatprep.subr.mxu0 0.0
        %425 = vmatpush2.msra.mxu0 0.0
        %426 = vmatprep.subr.mxu0 0.0
        %427 = vmatpush2.msra.mxu0 0.0
        %428 = vmatprep.subr.mxu0 0.0
        %429 = vmatpush2.msra.mxu0 0.0
        %430 = vmatprep.subr.mxu0 0.0
        %431 = vmatpush2.msra.mxu0 0.0
        %432 = vmatprep.mubr.f32.mxu0 0.0
        %433 = vmatmul.mubr.f32.gmra.mxu0 %v292
        %v434 = vpop.f32.mrf.mxu0
        %v435 = vadd.f32 0.0, %v434
        %v436 = vpop.f32.mrf.mxu0
        %437 = vdwg.mxu0
        %v438 = vadd.f32 %v294, %v364
        %v439 = vxor.u32 %v438, 2147483648
        %v440 = vmul.f32 %v439, 1.442695
        %v441 = vpow.pop %v440
        %v442 = vadd.f32 %v441, 1.0
        %v443 = vrcp.pop %v442
        %v444 = vmul.f32 1.0, %v443
        %v445 = vadd.f32 %v295, %v366
        %v446 = vxor.u32 %v445, 2147483648
        %v447 = vmul.f32 %v446, 1.442695
        %v448 = vpow.pop %v447
        %v449 = vadd.f32 %v448, 1.0
        %v450 = vrcp.pop %v449
        %v451 = vmul.f32 1.0, %v450
        %v452 = vadd.f32 %v435, %v290
        %v453 = vmul.f32 %v444, %v452
        %v454 = vadd.f32 %v296, %v453
        %v455 = vtanh.pop %v454
        %v456 = vsub.f32 1.0, %v451
        %v457 = vmul.f32 %v456, %v455
        %v458 = vmul.f32 %v451, %v292
        %v459 = vadd.f32 %v457, %v458
        %s460 = scalar_lea.vmem %s227, 16 [#allocation8]
        %461 = vst [vmem:[%s460] sm:$0xff] %v459
        %s462 = scalar_lea.vmem %s201, 24 [#allocation3]
        %v463 = vld [vmem:[%s462] sm:$0xff]
        %v464 = vld [vmem:[%s462 + $0x8] sm:$0xff]
        %v465 = vld [vmem:[%s462 + $0x10] sm:$0xff]
        %466 = vmatprep.subr.mxu0 %v283
        %467 = vmatpush1.msra.mxu0 %v282
        %468 = vmatprep.subr.mxu0 %v280
        %469 = vmatpush1.msra.mxu0 %v279
        %470 = vmatprep.subr.mxu0 %v277
        %471 = vmatpush1.msra.mxu0 %v276
        %472 = vmatprep.subr.mxu0 %v274
        %473 = vmatpush1.msra.mxu0 %v273
        %474 = vmatprep.subr.mxu0 %v271
        %475 = vmatpush1.msra.mxu0 %v270
        %476 = vmatprep.subr.mxu0 %v268
        %477 = vmatpush1.msra.mxu0 %v267
        %478 = vmatprep.subr.mxu0 %v265
        %479 = vmatpush1.msra.mxu0 %v264
        %480 = vmatprep.subr.mxu0 %v262
        %481 = vmatpush1.msra.mxu0 %v261
        %482 = vmatprep.subr.mxu0 %v259
        %483 = vmatpush1.msra.mxu0 %v258
        %484 = vmatprep.subr.mxu0 %v256
        %485 = vmatpush1.msra.mxu0 %v255
        %486 = vmatprep.subr.mxu0 %v253
        %487 = vmatpush1.msra.mxu0 %v252
        %488 = vmatprep.subr.mxu0 %v250
        %489 = vmatpush1.msra.mxu0 %v249
        %490 = vmatprep.subr.mxu0 %v247
        %491 = vmatpush1.msra.mxu0 %v246
        %492 = vmatprep.subr.mxu0 %v244
        %493 = vmatpush1.msra.mxu0 %v243
        %494 = vmatprep.subr.mxu0 %v241
        %495 = vmatpush1.msra.mxu0 %v240
        %496 = vmatprep.subr.mxu0 %v238
        %497 = vmatpush1.msra.mxu0 %v237
        %498 = vmatprep.subr.mxu0 0.0
        %499 = vmatpush2.msra.mxu0 0.0
        %500 = vmatprep.subr.mxu0 0.0
        %501 = vmatpush2.msra.mxu0 0.0
        %502 = vmatprep.subr.mxu0 0.0
        %503 = vmatpush2.msra.mxu0 0.0
        %504 = vmatprep.subr.mxu0 0.0
        %505 = vmatpush2.msra.mxu0 0.0
        %506 = vmatprep.subr.mxu0 0.0
        %507 = vmatpush2.msra.mxu0 0.0
        %508 = vmatprep.subr.mxu0 0.0
        %509 = vmatpush2.msra.mxu0 0.0
        %510 = vmatprep.subr.mxu0 0.0
        %511 = vmatpush2.msra.mxu0 0.0
        %512 = vmatprep.subr.mxu0 0.0
        %513 = vmatpush2.msra.mxu0 0.0
        %514 = vmatprep.subr.mxu0 0.0
        %515 = vmatpush2.msra.mxu0 0.0
        %516 = vmatprep.subr.mxu0 0.0
        %517 = vmatpush2.msra.mxu0 0.0
        %518 = vmatprep.subr.mxu0 0.0
        %519 = vmatpush2.msra.mxu0 0.0
        %520 = vmatprep.subr.mxu0 0.0
        %521 = vmatpush2.msra.mxu0 0.0
        %522 = vmatprep.subr.mxu0 0.0
        %523 = vmatpush2.msra.mxu0 0.0
        %524 = vmatprep.subr.mxu0 0.0
        %525 = vmatpush2.msra.mxu0 0.0
        %526 = vmatprep.subr.mxu0 0.0
        %527 = vmatpush2.msra.mxu0 0.0
        %528 = vmatprep.subr.mxu0 0.0
        %529 = vmatpush2.msra.mxu0 0.0
        %530 = vmatprep.mubr.f32.mxu0 0.0
        %531 = vmatmul.mubr.f32.gmra.mxu0 %v459
        %v532 = vpop.f32.mrf.mxu0
        %v533 = vadd.f32 0.0, %v532
        %v534 = vpop.f32.mrf.mxu0
        %v535 = vadd.f32 0.0, %v534
        %536 = vdwg.mxu0
        %537 = vmatprep.subr.mxu0 0.0
        %538 = vmatpush1.msra.mxu0 %v284
        %539 = vmatprep.subr.mxu0 0.0
        %540 = vmatpush1.msra.mxu0 %v281
        %541 = vmatprep.subr.mxu0 0.0
        %542 = vmatpush1.msra.mxu0 %v278
        %543 = vmatprep.subr.mxu0 0.0
        %544 = vmatpush1.msra.mxu0 %v275
        %545 = vmatprep.subr.mxu0 0.0
        %546 = vmatpush1.msra.mxu0 %v272
        %547 = vmatprep.subr.mxu0 0.0
        %548 = vmatpush1.msra.mxu0 %v269
        %549 = vmatprep.subr.mxu0 0.0
        %550 = vmatpush1.msra.mxu0 %v266
        %551 = vmatprep.subr.mxu0 0.0
        %552 = vmatpush1.msra.mxu0 %v263
        %553 = vmatprep.subr.mxu0 0.0
        %554 = vmatpush1.msra.mxu0 %v260
        %555 = vmatprep.subr.mxu0 0.0
        %556 = vmatpush1.msra.mxu0 %v257
        %557 = vmatprep.subr.mxu0 0.0
        %558 = vmatpush1.msra.mxu0 %v254
        %559 = vmatprep.subr.mxu0 0.0
        %560 = vmatpush1.msra.mxu0 %v251
        %561 = vmatprep.subr.mxu0 0.0
        %562 = vmatpush1.msra.mxu0 %v248
        %563 = vmatprep.subr.mxu0 0.0
        %564 = vmatpush1.msra.mxu0 %v245
        %565 = vmatprep.subr.mxu0 0.0
        %566 = vmatpush1.msra.mxu0 %v242
        %567 = vmatprep.subr.mxu0 0.0
        %568 = vmatpush1.msra.mxu0 %v239
        %569 = vmatprep.subr.mxu0 0.0
        %570 = vmatpush2.msra.mxu0 0.0
        %571 = vmatprep.subr.mxu0 0.0
        %572 = vmatpush2.msra.mxu0 0.0
        %573 = vmatprep.subr.mxu0 0.0
        %574 = vmatpush2.msra.mxu0 0.0
        %575 = vmatprep.subr.mxu0 0.0
        %576 = vmatpush2.msra.mxu0 0.0
        %577 = vmatprep.subr.mxu0 0.0
        %578 = vmatpush2.msra.mxu0 0.0
        %579 = vmatprep.subr.mxu0 0.0
        %580 = vmatpush2.msra.mxu0 0.0
        %581 = vmatprep.subr.mxu0 0.0
        %582 = vmatpush2.msra.mxu0 0.0
        %583 = vmatprep.subr.mxu0 0.0
        %584 = vmatpush2.msra.mxu0 0.0
        %585 = vmatprep.subr.mxu0 0.0
        %586 = vmatpush2.msra.mxu0 0.0
        %587 = vmatprep.subr.mxu0 0.0
        %588 = vmatpush2.msra.mxu0 0.0
        %589 = vmatprep.subr.mxu0 0.0
        %590 = vmatpush2.msra.mxu0 0.0
        %591 = vmatprep.subr.mxu0 0.0
        %592 = vmatpush2.msra.mxu0 0.0
        %593 = vmatprep.subr.mxu0 0.0
        %594 = vmatpush2.msra.mxu0 0.0
        %595 = vmatprep.subr.mxu0 0.0
        %596 = vmatpush2.msra.mxu0 0.0
        %597 = vmatprep.subr.mxu0 0.0
        %598 = vmatpush2.msra.mxu0 0.0
        %599 = vmatprep.subr.mxu0 0.0
        %600 = vmatpush2.msra.mxu0 0.0
        %601 = vmatprep.mubr.f32.mxu0 0.0
        %602 = vmatmul.mubr.f32.gmra.mxu0 %v459
        %v603 = vpop.f32.mrf.mxu0
        %v604 = vadd.f32 0.0, %v603
        %v605 = vpop.f32.mrf.mxu0
        %606 = vdwg.mxu0
        %v607 = vadd.f32 %v463, %v533
        %v608 = vxor.u32 %v607, 2147483648
        %v609 = vmul.f32 %v608, 1.442695
        %v610 = vpow.pop %v609
        %v611 = vadd.f32 %v610, 1.0
        %v612 = vrcp.pop %v611
        %v613 = vmul.f32 1.0, %v612
        %v614 = vadd.f32 %v464, %v535
        %v615 = vxor.u32 %v614, 2147483648
        %v616 = vmul.f32 %v615, 1.442695
        %v617 = vpow.pop %v616
        %v618 = vadd.f32 %v617, 1.0
        %v619 = vrcp.pop %v618
        %v620 = vmul.f32 1.0, %v619
        %v621 = vadd.f32 %v604, %v290
        %v622 = vmul.f32 %v613, %v621
        %v623 = vadd.f32 %v465, %v622
        %v624 = vtanh.pop %v623
        %v625 = vsub.f32 1.0, %v620
        %v626 = vmul.f32 %v625, %v624
        %v627 = vmul.f32 %v620, %v459
        %v628 = vadd.f32 %v626, %v627
        %s629 = scalar_lea.vmem %s227, 8 [#allocation8]
        %630 = vst [vmem:[%s629] sm:$0xff] %v628
        %v631 = vld [vmem:[%s201] sm:$0xff]
        %v632 = vld [vmem:[%s201 + $0x8] sm:$0xff]
        %v633 = vld [vmem:[%s201 + $0x10] sm:$0xff]
        %634 = vmatprep.subr.mxu0 %v283
        %635 = vmatpush1.msra.mxu0 %v282
        %636 = vmatprep.subr.mxu0 %v280
        %637 = vmatpush1.msra.mxu0 %v279
        %638 = vmatprep.subr.mxu0 %v277
        %639 = vmatpush1.msra.mxu0 %v276
        %640 = vmatprep.subr.mxu0 %v274
        %641 = vmatpush1.msra.mxu0 %v273
        %642 = vmatprep.subr.mxu0 %v271
        %643 = vmatpush1.msra.mxu0 %v270
        %644 = vmatprep.subr.mxu0 %v268
        %645 = vmatpush1.msra.mxu0 %v267
        %646 = vmatprep.subr.mxu0 %v265
        %647 = vmatpush1.msra.mxu0 %v264
        %648 = vmatprep.subr.mxu0 %v262
        %649 = vmatpush1.msra.mxu0 %v261
        %650 = vmatprep.subr.mxu0 %v259
        %651 = vmatpush1.msra.mxu0 %v258
        %652 = vmatprep.subr.mxu0 %v256
        %653 = vmatpush1.msra.mxu0 %v255
        %654 = vmatprep.subr.mxu0 %v253
        %655 = vmatpush1.msra.mxu0 %v252
        %656 = vmatprep.subr.mxu0 %v250
        %657 = vmatpush1.msra.mxu0 %v249
        %658 = vmatprep.subr.mxu0 %v247
        %659 = vmatpush1.msra.mxu0 %v246
        %660 = vmatprep.subr.mxu0 %v244
        %661 = vmatpush1.msra.mxu0 %v243
        %662 = vmatprep.subr.mxu0 %v241
        %663 = vmatpush1.msra.mxu0 %v240
        %664 = vmatprep.subr.mxu0 %v238
        %665 = vmatpush1.msra.mxu0 %v237
        %666 = vmatprep.subr.mxu0 0.0
        %667 = vmatpush2.msra.mxu0 0.0
        %668 = vmatprep.subr.mxu0 0.0
        %669 = vmatpush2.msra.mxu0 0.0
        %670 = vmatprep.subr.mxu0 0.0
        %671 = vmatpush2.msra.mxu0 0.0
        %672 = vmatprep.subr.mxu0 0.0
        %673 = vmatpush2.msra.mxu0 0.0
        %674 = vmatprep.subr.mxu0 0.0
        %675 = vmatpush2.msra.mxu0 0.0
        %676 = vmatprep.subr.mxu0 0.0
        %677 = vmatpush2.msra.mxu0 0.0
        %678 = vmatprep.subr.mxu0 0.0
        %679 = vmatpush2.msra.mxu0 0.0
        %680 = vmatprep.subr.mxu0 0.0
        %681 = vmatpush2.msra.mxu0 0.0
        %682 = vmatprep.subr.mxu0 0.0
        %683 = vmatpush2.msra.mxu0 0.0
        %684 = vmatprep.subr.mxu0 0.0
        %685 = vmatpush2.msra.mxu0 0.0
        %686 = vmatprep.subr.mxu0 0.0
        %687 = vmatpush2.msra.mxu0 0.0
        %688 = vmatprep.subr.mxu0 0.0
        %689 = vmatpush2.msra.mxu0 0.0
        %690 = vmatprep.subr.mxu0 0.0
        %691 = vmatpush2.msra.mxu0 0.0
        %692 = vmatprep.subr.mxu0 0.0
        %693 = vmatpush2.msra.mxu0 0.0
        %694 = vmatprep.subr.mxu0 0.0
        %695 = vmatpush2.msra.mxu0 0.0
        %696 = vmatprep.subr.mxu0 0.0
        %697 = vmatpush2.msra.mxu0 0.0
        %698 = vmatprep.mubr.f32.mxu0 0.0
        %699 = vmatmul.mubr.f32.gmra.mxu0 %v628
        %v700 = vpop.f32.mrf.mxu0
        %v701 = vadd.f32 0.0, %v700
        %v702 = vpop.f32.mrf.mxu0
        %v703 = vadd.f32 0.0, %v702
        %704 = vdwg.mxu0
        %705 = vmatprep.subr.mxu0 0.0
        %706 = vmatpush1.msra.mxu0 %v284
        %707 = vmatprep.subr.mxu0 0.0
        %708 = vmatpush1.msra.mxu0 %v281
        %709 = vmatprep.subr.mxu0 0.0
        %710 = vmatpush1.msra.mxu0 %v278
        %711 = vmatprep.subr.mxu0 0.0
        %712 = vmatpush1.msra.mxu0 %v275
        %713 = vmatprep.subr.mxu0 0.0
        %714 = vmatpush1.msra.mxu0 %v272
        %715 = vmatprep.subr.mxu0 0.0
        %716 = vmatpush1.msra.mxu0 %v269
        %717 = vmatprep.subr.mxu0 0.0
        %718 = vmatpush1.msra.mxu0 %v266
        %719 = vmatprep.subr.mxu0 0.0
        %720 = vmatpush1.msra.mxu0 %v263
        %721 = vmatprep.subr.mxu0 0.0
        %722 = vmatpush1.msra.mxu0 %v260
        %723 = vmatprep.subr.mxu0 0.0
        %724 = vmatpush1.msra.mxu0 %v257
        %725 = vmatprep.subr.mxu0 0.0
        %726 = vmatpush1.msra.mxu0 %v254
        %727 = vmatprep.subr.mxu0 0.0
        %728 = vmatpush1.msra.mxu0 %v251
        %729 = vmatprep.subr.mxu0 0.0
        %730 = vmatpush1.msra.mxu0 %v248
        %731 = vmatprep.subr.mxu0 0.0
        %732 = vmatpush1.msra.mxu0 %v245
        %733 = vmatprep.subr.mxu0 0.0
        %734 = vmatpush1.msra.mxu0 %v242
        %735 = vmatprep.subr.mxu0 0.0
        %736 = vmatpush1.msra.mxu0 %v239
        %737 = vmatprep.subr.mxu0 0.0
        %738 = vmatpush2.msra.mxu0 0.0
        %739 = vmatprep.subr.mxu0 0.0
        %740 = vmatpush2.msra.mxu0 0.0
        %741 = vmatprep.subr.mxu0 0.0
        %742 = vmatpush2.msra.mxu0 0.0
        %743 = vmatprep.subr.mxu0 0.0
        %744 = vmatpush2.msra.mxu0 0.0
        %745 = vmatprep.subr.mxu0 0.0
        %746 = vmatpush2.msra.mxu0 0.0
        %747 = vmatprep.subr.mxu0 0.0
        %748 = vmatpush2.msra.mxu0 0.0
        %749 = vmatprep.subr.mxu0 0.0
        %750 = vmatpush2.msra.mxu0 0.0
        %751 = vmatprep.subr.mxu0 0.0
        %752 = vmatpush2.msra.mxu0 0.0
        %753 = vmatprep.subr.mxu0 0.0
        %754 = vmatpush2.msra.mxu0 0.0
        %755 = vmatprep.subr.mxu0 0.0
        %756 = vmatpush2.msra.mxu0 0.0
        %757 = vmatprep.subr.mxu0 0.0
        %758 = vmatpush2.msra.mxu0 0.0
        %759 = vmatprep.subr.mxu0 0.0
        %760 = vmatpush2.msra.mxu0 0.0
        %761 = vmatprep.subr.mxu0 0.0
        %762 = vmatpush2.msra.mxu0 0.0
        %763 = vmatprep.subr.mxu0 0.0
        %764 = vmatpush2.msra.mxu0 0.0
        %765 = vmatprep.subr.mxu0 0.0
        %766 = vmatpush2.msra.mxu0 0.0
        %767 = vmatprep.subr.mxu0 0.0
        %768 = vmatpush2.msra.mxu0 0.0
        %769 = vmatprep.mubr.f32.mxu0 0.0
        %770 = vmatmul.mubr.f32.gmra.mxu0 %v628
        %v771 = vpop.f32.mrf.mxu0
        %v772 = vadd.f32 0.0, %v771
        %v773 = vpop.f32.mrf.mxu0
        %774 = vdwg.mxu0
        %v775 = vadd.f32 %v631, %v701
        %v776 = vxor.u32 %v775, 2147483648
        %v777 = vmul.f32 %v776, 1.442695
        %v778 = vpow.pop %v777
        %v779 = vadd.f32 %v778, 1.0
        %v780 = vrcp.pop %v779
        %v781 = vmul.f32 1.0, %v780
        %v782 = vadd.f32 %v632, %v703
        %v783 = vxor.u32 %v782, 2147483648
        %v784 = vmul.f32 %v783, 1.442695
        %v785 = vpow.pop %v784
        %v786 = vadd.f32 %v785, 1.0
        %v787 = vrcp.pop %v786
        %v788 = vmul.f32 1.0, %v787
        %v789 = vadd.f32 %v772, %v290
        %v790 = vmul.f32 %v781, %v789
        %v791 = vadd.f32 %v633, %v790
        %v792 = vtanh.pop %v791
        %v793 = vsub.f32 1.0, %v788
        %v794 = vmul.f32 %v793, %v792
        %v795 = vmul.f32 %v788, %v628
        %v796 = vadd.f32 %v794, %v795
        %797 = vst [vmem:[%s227] sm:$0xff] %v796
        %798 = vst [vmem:[#allocation2] sm:$0xff] %v796
        %s799 = sand.u32 %s117, 1
        %s800 = scalar_lea.sflag [#allocation5], %s799
        %s801 = sand.u32 %s117, 1
        %s802 = smul.addr %s801, 24
        %s803 = scalar_lea.vmem [#allocation8], %s802
        // Predicated region
        $region45: #{tpu_custom_call.1} parent=31 // pred_check
          %p804 = pneg %p127
        $region46: #{tpu_custom_call.1} parent=31 // pred_check_branch
          %806 = sbr.rel (%p804) target = $region48
        $region47: #{tpu_custom_call.1} parent=31 // pred_region
          %s807 = ssub.s32 2, %s26
          %s808 = smul.u32 3, %s807
          %s810 = ssub.s32 384, 384
          %811 = vsyncadd %s800, %s810
          %s812 = sadd.s32 %s25, %s808
          %s813 = smul.addr %s812, 128
          %s814 = scalar_lea.hbm %s3, %s813
          %s815 = sshll.u32 %s803, 4
          %s816 = int_to_ptr.vmem [resolvable:$true] %s815
          %821 = dma.vmem_to_hbm [thread:$0]  %s816, 384, %s814, %s800, 128, 128, 8
        $region48: #{tpu_custom_call.1} parent=31 // pred_fallthru
          _
      $region32: #{tpu_custom_call.1} parent=5 // pred_fallthru
        _
      %p822 = scmp.le.s32.totalorder 2, %s16
      // Predicated region
      $region49: #{tpu_custom_call.1} parent=5 // pred_check
        %p823 = pneg %p822
      $region50: #{tpu_custom_call.1} parent=5 // pred_check_branch
        %825 = sbr.rel (%p823) target = $region52
      $region51: #{tpu_custom_call.1} parent=5 // pred_region
        %s826 = ssub.s32 %s16, 2
        // Predicated region
        $region53: #{tpu_custom_call.1} parent=51 // pred_check
          %p827 = pneg %p133
        $region54: #{tpu_custom_call.1} parent=51 // pred_check_branch
          %829 = sbr.rel (%p827) target = $region56
        $region55: #{tpu_custom_call.1} parent=51 // pred_region
          %s830 = sand.u32 %s118, 1
          %s831 = scalar_lea.sflag [#allocation5], %s830
          %s832 = sand.u32 %s118, 1
          %s833 = smul.addr %s832, 24
          %s834 = scalar_lea.vmem [#allocation8], %s833
          %835 = dma.done %s831, 384
        $region56: #{tpu_custom_call.1} parent=51 // pred_fallthru
          _
      $region52: #{tpu_custom_call.1} parent=5 // pred_fallthru
        _
    $region6: #{tpu_custom_call.1} parent=1 // loop_footer
      %s20 = sadd.s32 1, %s16
    $region7: #{tpu_custom_call.1} parent=1 // loop_footer_branch
      %15 = sbr.rel target = $region3
    $region8: #{tpu_custom_call.1} parent=1 // loop_exit
      _
    %836 = vsyncpa [#allocation4], 1
    %s837 = scalar_lea.sflag [#allocation4], 1
    %838 = vsyncpa %s837, 1
    %839 = vsyncpa [#allocation7], 1
    %840 = vsyncpa [#allocation5], 1
    %s841 = scalar_lea.sflag [#allocation5], 1
    %842 = vsyncpa %s841, 1

</llo_original>
